<compile_context>
chip_gen: v7x
topology: tpu7x:2x2x1
jax: 0.10.0
libtpu: 0.0.40
codegen_flags: <defaults>
</compile_context>

<pallas_src>
import functools

import jax
import jax.numpy as jnp
from jax.experimental import pallas as pl
from jax.experimental.pallas import tpu as pltpu

HIDDEN = 128
N_IN = 4
N_ACT = 2
OUT_LANES = 8          # output slab lanes: 0/1 = probs, 2 = value, 3..7 = 0
VALUE_LANE = 2         # column of wv / bv inside the packed head slab
DIFF_LANE = 3          # column of (wa[:,1]-wa[:,0]) / (ba1-ba0)

# packed-parameter slab layout (rows x 128 lanes), all f32:
#   rows 0:4   -> w1 (4,128)            shared_net Linear(4,128) weight (in,out)
#   row  4     -> b1 (1,128)            shared_net bias
#   row  5     -> head bias: lane 2 = bv, lane 3 = ba1-ba0, rest 0
#   rows 6:8   -> zero padding (sublane alignment)
#   rows 8:136 -> head weights (128,128): col 2 = wv, col 3 = wa[:,1]-wa[:,0]
PARAM_ROWS = 8 + HIDDEN  # 136 (multiple of 8)


def a2c_kernel(x_ref, p_ref, out_ref):
    x = x_ref[...]                            # (TILE_B, 4) f32
    top = p_ref[0:8, :]                       # one aligned (8,128) tile
    b1 = top[4:5, :]                          # (1,128)
    b_heads = top[5:6, :]                     # (1,128)
    w_heads = p_ref[8:8 + HIDDEN, :]          # (128,128)

    # shared_net: Linear(4,128) + ReLU.  K=4 is far too small for the MXU, so
    # do 4 VPU broadcast-multiply-adds instead.
    h = b1 + x[:, 0:1] * top[0:1, :]
    for k in range(1, N_IN):
        h = h + x[:, k:k + 1] * top[k:k + 1, :]
    h = jnp.maximum(h, 0.0)                   # (TILE_B, 128)

    # Fused heads: one bf16 128x128 MXU matmul (f32 accumulate, f32 bias).
    heads = jnp.dot(h.astype(jnp.bfloat16), w_heads.astype(jnp.bfloat16),
                    preferred_element_type=jnp.float32) + b_heads

    # 2-class softmax via sigmoid on the pre-packed logit difference:
    # d = l1 - l0 comes straight out of lane DIFF_LANE, divide goes to the EUP.
    d = heads[:, DIFF_LANE:DIFF_LANE + 1]     # (TILE_B, 1)
    p0 = pl.reciprocal(1.0 + jnp.exp(d), approx=True)
    p1 = 1.0 - p0

    # 8-lane output slab: narrow masked stores, no lane broadcasts / selects.
    out_ref[...] = jnp.zeros_like(out_ref)
    out_ref[:, 0:1] = p0
    out_ref[:, 1:2] = p1
    out_ref[:, 2:3] = heads[:, VALUE_LANE:VALUE_LANE + 1]


def pack_params(w1, b1, wa, ba, wv, bv):
    """Pack all module parameters into a single (136,128) f32 slab."""
    f32 = jnp.float32
    w1 = w1.astype(f32)                                   # (4,128)
    b1 = b1.reshape(1, HIDDEN).astype(f32)                # (1,128)
    wa = wa.astype(f32)                                   # (128,2)
    ba = ba.reshape(N_ACT).astype(f32)                    # (2,)
    wv = wv.reshape(HIDDEN).astype(f32)                   # (128,)
    bv = bv.reshape(1).astype(f32)                        # (1,)

    w_heads = jnp.zeros((HIDDEN, HIDDEN), f32)
    w_heads = w_heads.at[:, VALUE_LANE].set(wv)
    w_heads = w_heads.at[:, DIFF_LANE].set(wa[:, 1] - wa[:, 0])

    b_heads = jnp.zeros((1, HIDDEN), f32)
    b_heads = b_heads.at[0, VALUE_LANE].set(bv[0])
    b_heads = b_heads.at[0, DIFF_LANE].set(ba[1] - ba[0])

    pad = jnp.zeros((2, HIDDEN), f32)
    return jnp.concatenate([w1, b1, b_heads, pad, w_heads], axis=0)  # (136,128)


@functools.partial(jax.jit, static_argnames=("tile_b",))
def a2c_forward(x, w1, b1, wa, ba, wv, bv, *, tile_b=4096):
    B = x.shape[0]
    params = pack_params(w1, b1, wa, ba, wv, bv)

    # Pad the batch only to a sublane multiple (8); the last grid block may be
    # partial.  Balance the tile across grid steps so tail waste is < 1 tile
    # and large batches always produce >= 2 parallel steps (v7x: 2 TCs).
    b_pad = ((max(B, 8) + 7) // 8) * 8
    if b_pad != B:
        x = jnp.pad(x, ((0, b_pad - B), (0, 0)))
    num_blocks = pl.cdiv(b_pad, tile_b)
    tile = ((pl.cdiv(b_pad, num_blocks) + 7) // 8) * 8
    grid = pl.cdiv(b_pad, tile)

    cost = pl.CostEstimate(
        flops=2 * b_pad * (N_IN * HIDDEN + HIDDEN * HIDDEN),
        transcendentals=b_pad,
        bytes_accessed=(b_pad * N_IN + PARAM_ROWS * HIDDEN
                        + b_pad * OUT_LANES) * 4)

    out = pl.pallas_call(
        a2c_kernel,
        out_shape=jax.ShapeDtypeStruct((b_pad, OUT_LANES), jnp.float32),
        grid=(grid,),
        in_specs=[
            pl.BlockSpec((tile, N_IN), lambda i: (i, 0)),           # states
            pl.BlockSpec((PARAM_ROWS, HIDDEN), lambda i: (0, 0)),   # packed params
        ],
        out_specs=pl.BlockSpec((tile, OUT_LANES), lambda i: (i, 0)),
        compiler_params=pltpu.CompilerParams(
            dimension_semantics=("parallel",)),
        cost_estimate=cost,
    )(x, params)

    action_probs = out[:B, 0:N_ACT]
    state_values = out[:B, N_ACT:N_ACT + 1]
    return action_probs, state_values


def init_params(key):
    # Shapes match the PyTorch module (weights stored (in, out) so that
    # x @ W + b == PyTorch's x @ W.T + b with W of shape (out, in)).
    k1, k2, k3, k4, k5, k6 = jax.random.split(key, 6)
    w1 = jax.random.normal(k1, (N_IN, HIDDEN), jnp.float32) * 0.1
    b1 = jax.random.normal(k2, (1, HIDDEN), jnp.float32) * 0.01
    wa = jax.random.normal(k3, (HIDDEN, N_ACT), jnp.float32) * 0.1
    ba = jax.random.normal(k4, (1, N_ACT), jnp.float32) * 0.01
    wv = jax.random.normal(k5, (HIDDEN, 1), jnp.float32) * 0.1
    bv = jax.random.normal(k6, (1, 1), jnp.float32) * 0.01
    return w1, b1, wa, ba, wv, bv


def reference_forward(x, w1, b1, wa, ba, wv, bv):
    hp = "highest"
    h = jnp.maximum(jnp.dot(x, w1, precision=hp) + b1, 0.0)
    probs = jax.nn.softmax(jnp.dot(h, wa, precision=hp) + ba, axis=-1)
    vals = jnp.dot(h, wv, precision=hp) + bv
    return probs, vals


if __name__ == "__main__":
    key = jax.random.PRNGKey(0)
    kx, kx2, kp = jax.random.split(key, 3)
    params = init_params(kp)

    # Small batch of CartPole-like states (feature dim 4).
    B = 8
    x = jax.random.normal(kx, (B, N_IN), jnp.float32)
    probs, vals = a2c_forward(x, *params)
    probs = jax.block_until_ready(probs)
    vals = jax.block_until_ready(vals)

    ref_probs, ref_vals = reference_forward(x, *params)
    assert probs.shape == (B, N_ACT) and vals.shape == (B, 1)
    # Tolerance covers the bf16 MXU head matmul + approx reciprocal.
    assert jnp.allclose(probs, ref_probs, atol=5e-3, rtol=5e-3)
    assert jnp.allclose(vals, ref_vals, atol=5e-3, rtol=5e-3)
    assert jnp.allclose(jnp.sum(probs, axis=-1), 1.0, atol=1e-5)

    # Second check: batch not a multiple of 8 (exercises padding path).
    B2 = 13
    x2 = jax.random.normal(kx2, (B2, N_IN), jnp.float32)
    probs2, vals2 = a2c_forward(x2, *params)
    probs2 = jax.block_until_ready(probs2)
    vals2 = jax.block_until_ready(vals2)
    ref_probs2, ref_vals2 = reference_forward(x2, *params)
    assert probs2.shape == (B2, N_ACT) and vals2.shape == (B2, 1)
    assert jnp.allclose(probs2, ref_probs2, atol=5e-3, rtol=5e-3)
    assert jnp.allclose(vals2, ref_vals2, atol=5e-3, rtol=5e-3)

    print("KERNEL_OK")
</pallas_src>

<mosaic_0001>
module attributes {stable_mosaic.version = 11 : i64} {
  func.func @a2c_kernel(%arg0: i32, %arg1: memref<8x4xf32, #tpu.memory_space<vmem>>, %arg2: memref<136x128xf32, #tpu.memory_space<vmem>>, %arg3: memref<8x8xf32, #tpu.memory_space<vmem>>) attributes {dimension_semantics = [#tpu.dimension_semantics<parallel>], iteration_bounds = array<i64: 1>, scalar_prefetch = 0 : i64, scratch_operands = 0 : i64, tpu.core_type = #tpu.core_type<tc>, window_params = [{transform_indices = @transform_0, window_bounds = array<i64: 8, 4>}, {pipeline_mode = #tpu.pipeline_mode<synchronous>, transform_indices = @transform_1, window_bounds = array<i64: 136, 128>}, {transform_indices = @transform_2, window_bounds = array<i64: 8, 8>}]} {
    %c0 = arith.constant 0 : index
    %c0_0 = arith.constant 0 : index
    %0 = vector.load %arg1[%c0, %c0_0] : memref<8x4xf32, #tpu.memory_space<vmem>>, vector<8x4xf32>
    %c0_1 = arith.constant 0 : index
    %c0_2 = arith.constant 0 : index
    %1 = vector.load %arg2[%c0_1, %c0_2] : memref<136x128xf32, #tpu.memory_space<vmem>>, vector<8x128xf32>
    %2 = vector.extract_strided_slice %1 {offsets = [4, 0], sizes = [1, 128], strides = [1, 1]} : vector<8x128xf32> to vector<1x128xf32>
    %3 = vector.extract_strided_slice %1 {offsets = [5, 0], sizes = [1, 128], strides = [1, 1]} : vector<8x128xf32> to vector<1x128xf32>
    %c8 = arith.constant 8 : index
    %c0_3 = arith.constant 0 : index
    %4 = vector.load %arg2[%c8, %c0_3] : memref<136x128xf32, #tpu.memory_space<vmem>>, vector<128x128xf32>
    %5 = vector.extract_strided_slice %0 {offsets = [0, 0], sizes = [8, 1], strides = [1, 1]} : vector<8x4xf32> to vector<8x1xf32>
    %6 = vector.extract_strided_slice %1 {offsets = [0, 0], sizes = [1, 128], strides = [1, 1]} : vector<8x128xf32> to vector<1x128xf32>
    %7 = vector.broadcast %5 : vector<8x1xf32> to vector<8x128xf32>
    %8 = vector.broadcast %6 : vector<1x128xf32> to vector<8x128xf32>
    %9 = arith.mulf %7, %8 : vector<8x128xf32>
    %10 = vector.broadcast %2 : vector<1x128xf32> to vector<8x128xf32>
    %11 = arith.addf %10, %9 : vector<8x128xf32>
    %12 = vector.extract_strided_slice %0 {offsets = [0, 1], sizes = [8, 1], strides = [1, 1]} : vector<8x4xf32> to vector<8x1xf32>
    %13 = vector.extract_strided_slice %1 {offsets = [1, 0], sizes = [1, 128], strides = [1, 1]} : vector<8x128xf32> to vector<1x128xf32>
    %14 = vector.broadcast %12 : vector<8x1xf32> to vector<8x128xf32>
    %15 = vector.broadcast %13 : vector<1x128xf32> to vector<8x128xf32>
    %16 = arith.mulf %14, %15 : vector<8x128xf32>
    %17 = arith.addf %11, %16 : vector<8x128xf32>
    %18 = vector.extract_strided_slice %0 {offsets = [0, 2], sizes = [8, 1], strides = [1, 1]} : vector<8x4xf32> to vector<8x1xf32>
    %19 = vector.extract_strided_slice %1 {offsets = [2, 0], sizes = [1, 128], strides = [1, 1]} : vector<8x128xf32> to vector<1x128xf32>
    %20 = vector.broadcast %18 : vector<8x1xf32> to vector<8x128xf32>
    %21 = vector.broadcast %19 : vector<1x128xf32> to vector<8x128xf32>
    %22 = arith.mulf %20, %21 : vector<8x128xf32>
    %23 = arith.addf %17, %22 : vector<8x128xf32>
    %24 = vector.extract_strided_slice %0 {offsets = [0, 3], sizes = [8, 1], strides = [1, 1]} : vector<8x4xf32> to vector<8x1xf32>
    %25 = vector.extract_strided_slice %1 {offsets = [3, 0], sizes = [1, 128], strides = [1, 1]} : vector<8x128xf32> to vector<1x128xf32>
    %26 = vector.broadcast %24 : vector<8x1xf32> to vector<8x128xf32>
    %27 = vector.broadcast %25 : vector<1x128xf32> to vector<8x128xf32>
    %28 = arith.mulf %26, %27 : vector<8x128xf32>
    %29 = arith.addf %23, %28 : vector<8x128xf32>
    %cst = arith.constant 0.000000e+00 : f32
    %30 = vector.broadcast %cst : f32 to vector<8x128xf32>
    %31 = arith.maximumf %29, %30 : vector<8x128xf32>
    %32 = arith.truncf %31 : vector<8x128xf32> to vector<8x128xbf16>
    %33 = arith.truncf %4 : vector<128x128xf32> to vector<128x128xbf16>
    %cst_4 = arith.constant dense<0.000000e+00> : vector<8x128xf32>
    %34 = tpu.matmul %32, %33, %cst_4 {dimension_numbers = #tpu.dot_dimension_numbers<[1], [0], [0], [1], [0, 0, 1, 1], [], []>} : vector<8x128xbf16>, vector<128x128xbf16>, vector<8x128xf32> -> vector<8x128xf32>
    %35 = vector.broadcast %3 : vector<1x128xf32> to vector<8x128xf32>
    %36 = arith.addf %34, %35 : vector<8x128xf32>
    %37 = vector.extract_strided_slice %36 {offsets = [0, 3], sizes = [8, 1], strides = [1, 1]} : vector<8x128xf32> to vector<8x1xf32>
    %38 = math.exp %37 : vector<8x1xf32>
    %cst_5 = arith.constant 1.000000e+00 : f32
    %39 = vector.broadcast %cst_5 : f32 to vector<8x1xf32>
    %40 = arith.addf %39, %38 : vector<8x1xf32>
    %41 = tpu.reciprocal %40 {approx = true} : vector<8x1xf32> -> vector<8x1xf32>
    %cst_6 = arith.constant 1.000000e+00 : f32
    %42 = vector.broadcast %cst_6 : f32 to vector<8x1xf32>
    %43 = arith.subf %42, %41 : vector<8x1xf32>
    %cst_7 = arith.constant 0.000000e+00 : f32
    %44 = vector.broadcast %cst_7 : f32 to vector<8x8xf32>
    %c0_8 = arith.constant 0 : index
    %c0_9 = arith.constant 0 : index
    %45 = vector.load %arg3[%c0_8, %c0_9] : memref<8x8xf32, #tpu.memory_space<vmem>>, vector<8x8xf32>
    tpu.vector_store %arg3[%c0_8, %c0_9], %44 {strides = array<i32>} : memref<8x8xf32, #tpu.memory_space<vmem>>, vector<8x8xf32>,
    %c0_10 = arith.constant 0 : index
    %c0_11 = arith.constant 0 : index
    %46 = vector.load %arg3[%c0_10, %c0_11] : memref<8x8xf32, #tpu.memory_space<vmem>>, vector<8x1xf32>
    tpu.vector_store %arg3[%c0_10, %c0_11], %41 {strides = array<i32>} : memref<8x8xf32, #tpu.memory_space<vmem>>, vector<8x1xf32>,
    %c0_12 = arith.constant 0 : index
    %c1 = arith.constant 1 : index
    %47 = vector.load %arg3[%c0_12, %c1] : memref<8x8xf32, #tpu.memory_space<vmem>>, vector<8x1xf32>
    tpu.vector_store %arg3[%c0_12, %c1], %43 {strides = array<i32>} : memref<8x8xf32, #tpu.memory_space<vmem>>, vector<8x1xf32>,
    %48 = vector.extract_strided_slice %36 {offsets = [0, 2], sizes = [8, 1], strides = [1, 1]} : vector<8x128xf32> to vector<8x1xf32>
    %c0_13 = arith.constant 0 : index
    %c2 = arith.constant 2 : index
    %49 = vector.load %arg3[%c0_13, %c2] : memref<8x8xf32, #tpu.memory_space<vmem>>, vector<8x1xf32>
    tpu.vector_store %arg3[%c0_13, %c2], %48 {strides = array<i32>} : memref<8x8xf32, #tpu.memory_space<vmem>>, vector<8x1xf32>,
    return
  }
  func.func @transform_0(%arg0: i32) -> (i32, i32) {
    %c0_i32 = arith.constant 0 : i32
    %c0_i32_0 = arith.constant 0 : i32
    return %arg0, %c0_i32 : i32, i32
  }
  func.func @transform_1(%arg0: i32) -> (i32, i32) {
    %c0_i32 = arith.constant 0 : i32
    %c0_i32_0 = arith.constant 0 : i32
    %c0_i32_1 = arith.constant 0 : i32
    return %c0_i32, %c0_i32_0 : i32, i32
  }
  func.func @transform_2(%arg0: i32) -> (i32, i32) {
    %c0_i32 = arith.constant 0 : i32
    %c0_i32_0 = arith.constant 0 : i32
    return %arg0, %c0_i32 : i32, i32
  }
}

</mosaic_0001>

<llo_original>
// kernel: a2c_forward.1
$region0: #{a2c_forward.1}
  #allocation0 [shape = 'u32[]', space=smem, size = 0x4, offset = 0x4, fixed_abs, tag = 'smem constant byte address 0x4 - core index']
  #allocation1 [shape = 'u32[144,128]{1,0:T(1,128)}', space=vmem, size = 0x12000, scoped, tag = 'internal scratch']
  %s0 = inlined_call_operand.vmem [shape: f32[8,4], index: 0, kind: input, shape index: {}]
  %s1 = inlined_call_operand.vmem [shape: f32[136,128], index: 1, kind: input, shape index: {}]
  %s2 = inlined_call_operand.vmem [shape: f32[8,8], index: 2, kind: output, shape index: {}]
  %s3 = sld [smem:[#allocation0]]
  $region18: #{a2c_forward.1} parent=0
    _
  %s5 = ssub.s32 1, %s3
  %s6 = scalar_select 0, %s5, %s3
  // Predicated region
  $region2: #{a2c_forward.1} parent=0 // pred_check
    _
  $region3: #{a2c_forward.1} parent=0 // pred_check_branch
    %8 = sbr.rel (0) target = $region5
  $region4: #{a2c_forward.1} parent=0 // pred_region
    _
  $region5: #{a2c_forward.1} parent=0 // pred_fallthru
    _
  // Predicated region
  $region6: #{a2c_forward.1} parent=0 // pred_check
    _
  $region7: #{a2c_forward.1} parent=0 // pred_check_branch
    %10 = sbr.rel (0) target = $region9
  $region8: #{a2c_forward.1} parent=0 // pred_region
    _
  $region9: #{a2c_forward.1} parent=0 // pred_fallthru
    _
  %v12 = vld [vmem:[%s0] sm:$0xff]
  %v13 = vld [vmem:[%s1] sm:$0xff]
  %v14 = vld [vmem:[%s1 + $0x8] sm:$0xff]
  %v15 = vld [vmem:[%s1 + $0x10] sm:$0xff]
  %v16 = vld [vmem:[%s1 + $0x18] sm:$0xff]
  %v17 = vld [vmem:[%s1 + $0x20] sm:$0xff]
  %v18 = vld [vmem:[%s1 + $0x28] sm:$0xff]
  %v19 = vld [vmem:[%s1 + $0x30] sm:$0xff]
  %v20 = vld [vmem:[%s1 + $0x38] sm:$0xff]
  %v21 = vld [vmem:[%s1 + $0x40] sm:$0xff]
  %v22 = vld [vmem:[%s1 + $0x48] sm:$0xff]
  %v23 = vld [vmem:[%s1 + $0x50] sm:$0xff]
  %v24 = vld [vmem:[%s1 + $0x58] sm:$0xff]
  %v25 = vld [vmem:[%s1 + $0x60] sm:$0xff]
  %v26 = vld [vmem:[%s1 + $0x68] sm:$0xff]
  %v27 = vld [vmem:[%s1 + $0x70] sm:$0xff]
  %v28 = vld [vmem:[%s1 + $0x78] sm:$0xff]
  %v29 = vld [vmem:[%s1 + $0x80] sm:$0xff]
  %31 = vset.pattern.permute.xlu0 0
  %32 = vperm.xlu0 %31, %v12
  %v33 = vpop.permute.xlu0 %32
  %v35 = vlaneseq
  %v36 = vshrl.u32 %v35, 7
  %v37 = vsub.s32 0, %v36
  %v38 = vrot.slane %v13, %v37
  %v39 = vmul.f32 %v33, %v38
  %v40 = vlaneseq
  %v41 = vshrl.u32 %v40, 7
  %v42 = vsub.s32 4, %v41
  %v43 = vrot.slane %v13, %v42
  %v44 = vadd.f32 %v43, %v39
  %45 = vset.pattern.permute.xlu0 1
  %46 = vperm.xlu0 %45, %v12
  %v47 = vpop.permute.xlu0 %46
  %v49 = vlaneseq
  %v50 = vshrl.u32 %v49, 7
  %v51 = vsub.s32 1, %v50
  %v52 = vrot.slane %v13, %v51
  %v53 = vmul.f32 %v47, %v52
  %v54 = vadd.f32 %v44, %v53
  %55 = vset.pattern.permute.xlu0 2
  %56 = vperm.xlu0 %55, %v12
  %v57 = vpop.permute.xlu0 %56
  %v59 = vlaneseq
  %v60 = vshrl.u32 %v59, 7
  %v61 = vsub.s32 2, %v60
  %v62 = vrot.slane %v13, %v61
  %v63 = vmul.f32 %v57, %v62
  %v64 = vadd.f32 %v54, %v63
  %65 = vset.pattern.permute.xlu0 3
  %66 = vperm.xlu0 %65, %v12
  %v67 = vpop.permute.xlu0 %66
  %v69 = vlaneseq
  %v70 = vshrl.u32 %v69, 7
  %v71 = vsub.s32 3, %v70
  %v72 = vrot.slane %v13, %v71
  %v73 = vmul.f32 %v67, %v72
  %v74 = vadd.f32 %v64, %v73
  %v75 = vmax.f32 %v74, 0.0
  %v76 = vpack.c.bf16 %v75, %v75
  %v77 = vpack.c.bf16 %v15, %v14
  %v78 = vpack.c.bf16 %v17, %v16
  %v79 = vpack.c.bf16 %v19, %v18
  %v80 = vpack.c.bf16 %v21, %v20
  %v81 = vpack.c.bf16 %v23, %v22
  %v82 = vpack.c.bf16 %v25, %v24
  %v83 = vpack.c.bf16 %v27, %v26
  %v84 = vpack.c.bf16 %v29, %v28
  %v85 = vlaneseq
  %v86 = vshrl.u32 %v85, 7
  %v87 = vsub.s32 5, %v86
  %v88 = vrot.slane %v13, %v87
  %89 = vmatprep.subr.bf16.mxu0 0
  %90 = vmatpush1.bf16.msra.mxu0 %v77
  %91 = vmatprep.subr.bf16.mxu0 0
  %92 = vmatpush1.bf16.msra.mxu0 %v78
  %93 = vmatprep.subr.bf16.mxu0 0
  %94 = vmatpush1.bf16.msra.mxu0 %v79
  %95 = vmatprep.subr.bf16.mxu0 0
  %96 = vmatpush1.bf16.msra.mxu0 %v80
  %97 = vmatprep.subr.bf16.mxu0 0
  %98 = vmatpush1.bf16.msra.mxu0 %v81
  %99 = vmatprep.subr.bf16.mxu0 0
  %100 = vmatpush1.bf16.msra.mxu0 %v82
  %101 = vmatprep.subr.bf16.mxu0 0
  %102 = vmatpush1.bf16.msra.mxu0 %v83
  %103 = vmatprep.subr.bf16.mxu0 0
  %104 = vmatpush1.bf16.msra.mxu0 %v84
  %105 = vmatprep.subr.bf16.mxu0 0
  %106 = vmatpush1.bf16.msra.mxu0 0
  %107 = vmatprep.subr.bf16.mxu0 0
  %108 = vmatpush1.bf16.msra.mxu0 0
  %109 = vmatprep.subr.bf16.mxu0 0
  %110 = vmatpush1.bf16.msra.mxu0 0
  %111 = vmatprep.subr.bf16.mxu0 0
  %112 = vmatpush1.bf16.msra.mxu0 0
  %113 = vmatprep.subr.bf16.mxu0 0
  %114 = vmatpush1.bf16.msra.mxu0 0
  %115 = vmatprep.subr.bf16.mxu0 0
  %116 = vmatpush1.bf16.msra.mxu0 0
  %117 = vmatprep.subr.bf16.mxu0 0
  %118 = vmatpush1.bf16.msra.mxu0 0
  %119 = vmatprep.subr.bf16.mxu0 0
  %120 = vmatpush1.bf16.msra.mxu0 0
  %121 = vmatprep.mubr.bf16.mxu0 0
  %122 = vmatmul.mubr.bf16.gmra.mrb[0].mxu0 %v76
  %v123 = vpop.f32.mrb[0].mxu0
  %v124 = vadd.f32 %v88, %v123
  %v125 = vpop.f32.mrb[0].mxu0
  %v126 = vpop.f32.mrb[0].mxu0
  %v127 = vpop.f32.mrb[0].mxu0
  %128 = vdwg.mxu0
  %v129 = vmul.f32 %v124, 1.442695
  %v130 = vpow.pop %v129
  %v131 = vadd.f32 %v130, 1.0
  %v132 = vrcp.pop %v131
  %v133 = vsub.f32 1.0, %v132
  %vm134 = vcmask 64512
  %135 = vst.msk [vmem:[%s2] sm:$0xff] %vm134, 0.0
  %137 = vrot.lane.b32.xlu0 %v132, 125
  %v138 = vpop.permute.xlu0 %137
  %vm140 = vcmask 7168
  %141 = vst.msk [vmem:[%s2] sm:$0xff] %vm140, %v138
  %143 = vrot.lane.b32.xlu0 %v133, 126
  %v144 = vpop.permute.xlu0 %143
  %vm146 = vcmask 15368
  %147 = vst.msk [vmem:[%s2] sm:$0xff] %vm146, %v144
  %vm148 = vcmask 23568
  %149 = vst.msk [vmem:[%s2] sm:$0xff] %vm148, %v124
  // Predicated region
  $region10: #{a2c_forward.1} parent=0 // pred_check
    _
  $region11: #{a2c_forward.1} parent=0 // pred_check_branch
    %151 = sbr.rel (0) target = $region13
  $region12: #{a2c_forward.1} parent=0 // pred_region
    _
  $region13: #{a2c_forward.1} parent=0 // pred_fallthru
    _
  // Predicated region
  $region14: #{a2c_forward.1} parent=0 // pred_check
    _
  $region15: #{a2c_forward.1} parent=0 // pred_check_branch
    %153 = sbr.rel (0) target = $region17
  $region16: #{a2c_forward.1} parent=0 // pred_region
    _
  $region17: #{a2c_forward.1} parent=0 // pred_fallthru
    _

</llo_original>
